<compile_context>
chip_gen: v7x
topology: tpu7x:2x2x1
jax: 0.10.0
libtpu: 0.0.40
codegen_flags: <defaults>
</compile_context>

<pallas_src>
import functools

import jax
import jax.numpy as jnp
from jax.experimental import pallas as pl
from jax.experimental.pallas import tpu as pltpu

LN_EPS = 1e-5  # nn.LayerNorm default


def _patch_embed_kernel(p_ref, w_ref, b_ref, g_ref, beta_ref, o_ref):
    # p_ref: (tm, K) bf16 patch rows; w_ref: (K, N) bf16 flattened conv weight;
    # b_ref/g_ref/beta_ref: (1, N) f32; o_ref: (tm, N) f32 (or bf16 if opted in).
    acc = jnp.dot(p_ref[...], w_ref[...], preferred_element_type=jnp.float32)
    acc = acc + b_ref[...]
    # LayerNorm over embed_dim (last axis), PyTorch two-pass biased variance,
    # all math in f32. rsqrt goes to the EUP (separate bundle slot, ~free).
    mean = jnp.mean(acc, axis=-1, keepdims=True)
    centered = acc - mean
    var = jnp.mean(centered * centered, axis=-1, keepdims=True)
    xhat = centered * jax.lax.rsqrt(var + LN_EPS)
    o_ref[...] = (xhat * g_ref[...] + beta_ref[...]).astype(o_ref.dtype)


def _choose_row_tile(m_pad, max_tm=4096):
    """Largest multiple-of-16 divisor of m_pad <= max_tm.

    Preference order: (a) grid count even and >= 4 (keeps both v7x TensorCores
    busy on every step of the 'parallel' axis), (b) grid count >= 2, (c) any.
    On v5e/v6e (1 TC) the preference is harmless."""
    cands = [t for t in range(16, min(max_tm, m_pad) + 1, 16) if m_pad % t == 0]
    if not cands:
        return 16
    for pred in (lambda t: (m_pad // t) >= 4 and (m_pad // t) % 2 == 0,
                 lambda t: (m_pad // t) >= 2):
        sel = [t for t in cands if pred(t)]
        if sel:
            return max(sel)
    return max(cands)


def patch_embed_layernorm(patches, w_flat, bias, gamma, beta, *,
                          out_dtype=jnp.float32, max_tm=4096):
    """patches: (M, K) bf16; w_flat: (K, N); bias/gamma/beta: (N,).
    Returns (M, N) in out_dtype (f32 default = PyTorch semantics; bf16 opt-in
    halves the dominant output writeback stream).

    Matmul operands are bf16 (f32 accumulation on the MXU); LayerNorm math is f32.
    K<=64 and N=128, so the kernel is HBM-bound on every TPU generation ->
    bandwidth-first tiling with a large, lane-dense (N=128) output block."""
    M, K = patches.shape
    N = w_flat.shape[1]

    # Pad rows only when M is not a multiple of 16 (bf16 sublane tile); padded rows
    # are sliced off after the call. For standard shapes (224/4 patches) M is already
    # a multiple of 16, so no extra HBM copy is made.
    # TODO(synk): mask the last grid step instead of jnp.pad for ragged M.
    M_pad = pl.cdiv(M, 16) * 16
    if M_pad != M:
        patches = jnp.pad(patches, ((0, M_pad - M), (0, 0)))
    tm = _choose_row_tile(M_pad, max_tm)

    patches_bf16 = patches.astype(jnp.bfloat16)
    w_bf16 = w_flat.astype(jnp.bfloat16)
    bias2 = bias.reshape(1, N).astype(jnp.float32)
    gamma2 = gamma.reshape(1, N).astype(jnp.float32)
    beta2 = beta.reshape(1, N).astype(jnp.float32)

    out_bytes = jnp.dtype(out_dtype).itemsize
    cost = pl.CostEstimate(
        flops=2 * M_pad * K * N + 10 * M_pad * N,
        transcendentals=M_pad,  # one rsqrt per patch row
        bytes_accessed=M_pad * K * 2 + K * N * 2 + M_pad * N * out_bytes + 3 * N * 4,
    )

    # VMEM budget (double-buffered) at tm=4096: ~(4096*64*2 + 4096*128*4)*2 ≈ 5 MiB,
    # well under v5e's 16 MiB scoped default and v7x's 32 MiB scoped / 64 MiB
    # physical per-TC budget; pinned explicitly to be safe on every generation.
    out = pl.pallas_call(
        _patch_embed_kernel,
        out_shape=jax.ShapeDtypeStruct((M_pad, N), out_dtype),
        grid_spec=pltpu.PrefetchScalarGridSpec(
            num_scalar_prefetch=0,
            grid=(M_pad // tm,),
            in_specs=[
                pl.BlockSpec((tm, K), lambda i: (i, 0)),
                pl.BlockSpec((K, N), lambda i: (0, 0)),
                pl.BlockSpec((1, N), lambda i: (0, 0)),
                pl.BlockSpec((1, N), lambda i: (0, 0)),
                pl.BlockSpec((1, N), lambda i: (0, 0)),
            ],
            out_specs=pl.BlockSpec((tm, N), lambda i: (i, 0)),
        ),
        compiler_params=pltpu.CompilerParams(
            dimension_semantics=("parallel",),  # megacore-sharded on v7x
            vmem_limit_bytes=32 * 1024 * 1024,
        ),
        cost_estimate=cost,
    )(patches_bf16, w_bf16, bias2, gamma2, beta2)
    return out[:M] if M_pad != M else out


def _extract_patches(x, patch_size):
    """x: (B, C, H, W) -> (B*Hp*Wp, C*p*p) with column order (c, kh, kw),
    matching PyTorch Conv2d weight (O, C, kh, kw) flattened to (C*p*p, O).
    Called on bf16 input inside a jit so the convert fuses into this single
    transpose copy (one HBM pass)."""
    B, C, H, W = x.shape
    p = patch_size
    Hp, Wp = H // p, W // p
    x = x.reshape(B, C, Hp, p, Wp, p)
    x = jnp.transpose(x, (0, 2, 4, 1, 3, 5))        # (B, Hp, Wp, C, p, p)
    return x.reshape(B * Hp * Wp, C * p * p), (Hp, Wp)


def _embed_forward(x, w_flat_bf16, bias, gamma, beta, *,
                   img_size, patch_size, out_dtype):
    B, C, H, W = x.shape
    if (H, W) != (img_size, img_size):
        # Resize in bf16: halves the resize writeback and folds the convert pass.
        # TODO(synk): torchvision Resize antialias semantics not reproduced exactly;
        # plain bilinear resize used here (identity at matching sizes).
        x = jax.image.resize(x.astype(jnp.bfloat16),
                             (B, C, img_size, img_size), method="bilinear")
    else:
        x = x.astype(jnp.bfloat16)
    # maybe_pad is a no-op since img_size % patch_size == 0.
    patches, (Hp, Wp) = _extract_patches(x, patch_size)
    out = patch_embed_layernorm(patches, w_flat_bf16, bias, gamma, beta,
                                out_dtype=out_dtype)
    return out.reshape(B, Hp * Wp, -1)


class Wrapper2DPallas:
    """JAX/Pallas equivalent of wrapper2D with output_raw=True (embedder output)."""

    def __init__(self, input_shape, embed_dim=128, patch_size=4, img_size=16,
                 out_dtype=jnp.float32, key=jax.random.PRNGKey(0)):
        # NOTE: the PyTorch module hardcodes img_size=224, embed_dim=128, patch=4;
        # img_size is a parameter so the demo can run at small spatial size.
        self.in_channels = input_shape[1]
        self.patch_size = patch_size
        self.img_size = img_size
        self.embed_dim = embed_dim
        self.patched_dimensions = (img_size // patch_size, img_size // patch_size)

        k1, k2, k3, k4 = jax.random.split(key, 4)
        C, p, N = self.in_channels, patch_size, embed_dim
        # Deterministic synthetic init (pretrained Swin weights are not loadable
        # here); small non-trivial values so the kernel paths are exercised.
        conv_w = 0.02 * jax.random.normal(k1, (N, C, p, p), dtype=jnp.float32)
        conv_b = 0.02 * jax.random.normal(k2, (N,), dtype=jnp.float32)
        # flatten conv weight (O, C, kh, kw) -> (C*p*p, O); keep an f32 master copy,
        # cast the kernel operand to bf16 once at init.
        self.w_flat = jnp.transpose(conv_w.reshape(N, C * p * p))
        self.w_flat_bf16 = self.w_flat.astype(jnp.bfloat16)
        self.bias = conv_b
        self.ln_gamma = 1.0 + 0.02 * jax.random.normal(k3, (N,), dtype=jnp.float32)
        self.ln_beta = 0.02 * jax.random.normal(k4, (N,), dtype=jnp.float32)

        # One jitted forward: cast + patch transpose + pallas_call fuse/pipeline
        # inside a single XLA executable (no eager per-op dispatch, one pre-kernel
        # HBM pass instead of two).
        self._forward = jax.jit(functools.partial(
            _embed_forward, img_size=img_size, patch_size=patch_size,
            out_dtype=out_dtype))

    def __call__(self, x):
        # x: (B, C, H, W) float32, NCHW
        return self._forward(x, self.w_flat_bf16, self.bias,
                             self.ln_gamma, self.ln_beta)


if __name__ == "__main__":
    # small shapes: batch=2, channels=4, spatial=16 -> img_size=16, patch=4
    # -> 16 patches of dim 128 per image
    B, C, H, W = 2, 4, 16, 16
    x = jax.random.normal(jax.random.PRNGKey(0), (B, C, H, W), dtype=jnp.float32)

    model = Wrapper2DPallas(input_shape=(B, C, H, W), embed_dim=128,
                            patch_size=4, img_size=16,
                            key=jax.random.PRNGKey(0))
    y = model(x)
    y = jax.block_until_ready(y)
    assert y.shape == (B, (16 // 4) * (16 // 4), 128), y.shape
    assert y.dtype == jnp.float32, y.dtype

    def _ref(pm, wm):
        r = jnp.dot(pm.astype(jnp.float32), wm.astype(jnp.float32)) + model.bias
        mu = r.mean(-1, keepdims=True)
        var = ((r - mu) ** 2).mean(-1, keepdims=True)
        out = (r - mu) / jnp.sqrt(var + LN_EPS) * model.ln_gamma + model.ln_beta
        return out.reshape(B, -1, 128)

    # check 1: same bf16-quantized operands, f32 math -> tight check of the kernel.
    patches_bf, _ = _extract_patches(x.astype(jnp.bfloat16), 4)
    ref_bf = _ref(patches_bf, model.w_flat_bf16)
    assert jnp.allclose(y, ref_bf, atol=2e-3, rtol=2e-3), \
        float(jnp.max(jnp.abs(y - ref_bf)))

    # check 2: full f32 path (original-module semantics); loose tol covers the
    # bf16 input/weight rounding introduced for bandwidth.
    patches_f32, _ = _extract_patches(x, 4)
    ref_f32 = _ref(patches_f32, model.w_flat)
    assert jnp.allclose(y, ref_f32, atol=5e-2, rtol=5e-2), \
        float(jnp.max(jnp.abs(y - ref_f32)))

    print("KERNEL_OK")
</pallas_src>

<mosaic_0001>
module attributes {stable_mosaic.version = 11 : i64} {
  func.func @_patch_embed_kernel(%arg0: i32, %arg1: memref<16x64xbf16, #tpu.memory_space<vmem>>, %arg2: memref<64x128xbf16, #tpu.memory_space<vmem>>, %arg3: memref<1x128xf32, #tpu.memory_space<vmem>>, %arg4: memref<1x128xf32, #tpu.memory_space<vmem>>, %arg5: memref<1x128xf32, #tpu.memory_space<vmem>>, %arg6: memref<16x128xf32, #tpu.memory_space<vmem>>) attributes {dimension_semantics = [#tpu.dimension_semantics<parallel>], iteration_bounds = array<i64: 2>, scalar_prefetch = 0 : i64, scratch_operands = 0 : i64, tpu.core_type = #tpu.core_type<tc>, window_params = [{transform_indices = @transform_0, window_bounds = array<i64: 16, 64>}, {pipeline_mode = #tpu.pipeline_mode<synchronous>, transform_indices = @transform_1, window_bounds = array<i64: 64, 128>}, {pipeline_mode = #tpu.pipeline_mode<synchronous>, transform_indices = @transform_2, window_bounds = array<i64: 1, 128>}, {pipeline_mode = #tpu.pipeline_mode<synchronous>, transform_indices = @transform_3, window_bounds = array<i64: 1, 128>}, {pipeline_mode = #tpu.pipeline_mode<synchronous>, transform_indices = @transform_4, window_bounds = array<i64: 1, 128>}, {transform_indices = @transform_5, window_bounds = array<i64: 16, 128>}]} {
    %c0 = arith.constant 0 : index
    %c0_0 = arith.constant 0 : index
    %0 = vector.load %arg1[%c0, %c0_0] : memref<16x64xbf16, #tpu.memory_space<vmem>>, vector<16x64xbf16>
    %c0_1 = arith.constant 0 : index
    %c0_2 = arith.constant 0 : index
    %1 = vector.load %arg2[%c0_1, %c0_2] : memref<64x128xbf16, #tpu.memory_space<vmem>>, vector<64x128xbf16>
    %cst = arith.constant dense<0.000000e+00> : vector<16x128xf32>
    %2 = tpu.matmul %0, %1, %cst {dimension_numbers = #tpu.dot_dimension_numbers<[1], [0], [0], [1], [0, 0, 1, 1], [], []>} : vector<16x64xbf16>, vector<64x128xbf16>, vector<16x128xf32> -> vector<16x128xf32>
    %c0_3 = arith.constant 0 : index
    %c0_4 = arith.constant 0 : index
    %3 = vector.load %arg3[%c0_3, %c0_4] : memref<1x128xf32, #tpu.memory_space<vmem>>, vector<1x128xf32>
    %4 = vector.broadcast %3 : vector<1x128xf32> to vector<16x128xf32>
    %5 = arith.addf %2, %4 : vector<16x128xf32>
    %cst_5 = arith.constant dense<0.000000e+00> : vector<16xf32>
    %6 = vector.multi_reduction <add>, %5, %cst_5 [1] : vector<16x128xf32> to vector<16xf32>
    %7 = vector.shape_cast %6 : vector<16xf32> to vector<16x1xf32>
    %cst_6 = arith.constant 1.280000e+02 : f32
    %8 = vector.broadcast %cst_6 : f32 to vector<16x1xf32>
    %9 = arith.divf %7, %8 : vector<16x1xf32>
    %10 = vector.broadcast %9 : vector<16x1xf32> to vector<16x128xf32>
    %11 = arith.subf %5, %10 : vector<16x128xf32>
    %12 = arith.mulf %11, %11 : vector<16x128xf32>
    %cst_7 = arith.constant dense<0.000000e+00> : vector<16xf32>
    %13 = vector.multi_reduction <add>, %12, %cst_7 [1] : vector<16x128xf32> to vector<16xf32>
    %14 = vector.shape_cast %13 : vector<16xf32> to vector<16x1xf32>
    %cst_8 = arith.constant 1.280000e+02 : f32
    %15 = vector.broadcast %cst_8 : f32 to vector<16x1xf32>
    %16 = arith.divf %14, %15 : vector<16x1xf32>
    %cst_9 = arith.constant 9.99999974E-6 : f32
    %17 = vector.broadcast %cst_9 : f32 to vector<16x1xf32>
    %18 = arith.addf %16, %17 : vector<16x1xf32>
    %19 = math.rsqrt %18 : vector<16x1xf32>
    %20 = vector.broadcast %19 : vector<16x1xf32> to vector<16x128xf32>
    %21 = arith.mulf %11, %20 : vector<16x128xf32>
    %c0_10 = arith.constant 0 : index
    %c0_11 = arith.constant 0 : index
    %22 = vector.load %arg4[%c0_10, %c0_11] : memref<1x128xf32, #tpu.memory_space<vmem>>, vector<1x128xf32>
    %23 = vector.broadcast %22 : vector<1x128xf32> to vector<16x128xf32>
    %24 = arith.mulf %21, %23 : vector<16x128xf32>
    %c0_12 = arith.constant 0 : index
    %c0_13 = arith.constant 0 : index
    %25 = vector.load %arg5[%c0_12, %c0_13] : memref<1x128xf32, #tpu.memory_space<vmem>>, vector<1x128xf32>
    %26 = vector.broadcast %25 : vector<1x128xf32> to vector<16x128xf32>
    %27 = arith.addf %24, %26 : vector<16x128xf32>
    %c0_14 = arith.constant 0 : index
    %c0_15 = arith.constant 0 : index
    %28 = vector.load %arg6[%c0_14, %c0_15] : memref<16x128xf32, #tpu.memory_space<vmem>>, vector<16x128xf32>
    tpu.vector_store %arg6[%c0_14, %c0_15], %27 {strides = array<i32>} : memref<16x128xf32, #tpu.memory_space<vmem>>, vector<16x128xf32>,
    return
  }
  func.func @transform_0(%arg0: i32) -> (i32, i32) {
    %c0_i32 = arith.constant 0 : i32
    %c0_i32_0 = arith.constant 0 : i32
    return %arg0, %c0_i32 : i32, i32
  }
  func.func @transform_1(%arg0: i32) -> (i32, i32) {
    %c0_i32 = arith.constant 0 : i32
    %c0_i32_0 = arith.constant 0 : i32
    %c0_i32_1 = arith.constant 0 : i32
    return %c0_i32, %c0_i32_0 : i32, i32
  }
  func.func @transform_2(%arg0: i32) -> (i32, i32) {
    %c0_i32 = arith.constant 0 : i32
    %c0_i32_0 = arith.constant 0 : i32
    %c0_i32_1 = arith.constant 0 : i32
    return %c0_i32, %c0_i32_0 : i32, i32
  }
  func.func @transform_3(%arg0: i32) -> (i32, i32) {
    %c0_i32 = arith.constant 0 : i32
    %c0_i32_0 = arith.constant 0 : i32
    %c0_i32_1 = arith.constant 0 : i32
    return %c0_i32, %c0_i32_0 : i32, i32
  }
  func.func @transform_4(%arg0: i32) -> (i32, i32) {
    %c0_i32 = arith.constant 0 : i32
    %c0_i32_0 = arith.constant 0 : i32
    %c0_i32_1 = arith.constant 0 : i32
    return %c0_i32, %c0_i32_0 : i32, i32
  }
  func.func @transform_5(%arg0: i32) -> (i32, i32) {
    %c0_i32 = arith.constant 0 : i32
    %c0_i32_0 = arith.constant 0 : i32
    return %arg0, %c0_i32 : i32, i32
  }
}

</mosaic_0001>

<llo_original>
// kernel: _embed_forward.1
$region0: #{_embed_forward.1}
  #allocation0 [shape = 'u32[]', space=smem, size = 0x4, offset = 0x4, fixed_abs, tag = 'smem constant byte address 0x4 - core index']
  #allocation1 [shape = 'u32[144,128]{1,0:T(1,128)}', space=vmem, size = 0x12000, scoped, tag = 'internal scratch']
  %s0 = inlined_call_operand.vmem [shape: bf16[32,64], index: 0, kind: input, shape index: {}]
  %s1 = inlined_call_operand.vmem [shape: bf16[64,128], index: 1, kind: input, shape index: {}]
  %s2 = inlined_call_operand.vmem [shape: f32[1,128], index: 2, kind: input, shape index: {}]
  %s3 = inlined_call_operand.vmem [shape: f32[1,128], index: 3, kind: input, shape index: {}]
  %s4 = inlined_call_operand.vmem [shape: f32[1,128], index: 4, kind: input, shape index: {}]
  %s5 = inlined_call_operand.hbm [shape: f32[32,128], index: 5, kind: output, shape index: {}]
  %s6 = sld [smem:[#allocation0]]
  $region53: #{_embed_forward.1} parent=0
    _
  %s8 = ssub.s32 1, %s6
  %s9 = scalar_select 0, %s8, %s6
  $region1: #{_embed_forward.1} parent=0
    #allocation2 [shape = 'u8[16384]{0}', space=vmem, size = 0x4000, scoped, tag = 'output window, operand 0']
    #allocation3 [shape = 's32[2]{0}', space=sflag, size = 0x8, scoped, tag = 'scoped memory for _embed_forward.1']
    %10 = vsyncpa [#allocation3], 0
    %s11 = scalar_lea.sflag [#allocation3], 1
    %12 = vsyncpa %s11, 0
    loop: start=0, step=1, limit=4
    $region2: #{_embed_forward.1} parent=1 // loop_pre_header
      _
    $region3: #{_embed_forward.1} parent=1 // loop_header
      %s14 = sphi 0, %s18
      %p15 = scmp.ge.s32.totalorder %s14, 4
      %s24 = sphi 0, %s26
      %s27 = sphi 0, %s24
      %s28 = sphi 0, %s27
      %s44 = sphi 0, %s28
      %s48 = sphi 0, %s48
      %s50 = sphi 0, %s48
      %s51 = sphi 0, %s50
      %s65 = sphi 0, %s51
      %s69 = sphi 0, %s69
      %s71 = sphi 0, %s69
      %s72 = sphi 0, %s71
      %s86 = sphi 0, %s72
      %s90 = sphi 0, %s90
      %s92 = sphi 0, %s90
      %s93 = sphi 0, %s92
      %s107 = sphi 0, %s93
      %s111 = sphi 0, %s111
      %s113 = sphi 0, %s111
      %s114 = sphi 0, %s113
      %s128 = sphi 0, %s114
      %s134 = sphi 0, %s136
      %s137 = sphi 0, %s134
      %s138 = sphi 0, %s137
      %s154 = sphi 0, %s138
    $region4: #{_embed_forward.1} parent=1 // loop_header_branch
      %17 = sbr.rel (%p15) target = $region8
    $region5: #{_embed_forward.1} parent=1 // loop_body
      %s19 = ssub.s32 %s14, 1
      %s20 = ssub.s32 %s14, 2
      %s21 = sadd.s32 %s14, 1
      %s22 = ssub.s32 %s14, %s21
      %p23 = scmp.eq.s32.totalorder %s22, 0
      %s25 = sadd.s32 %s24, 1
      %s26 = scalar_select %p23, %s24, %s25
      %p29 = pneg %p23
      %p30 = scmp.eq.s32.totalorder %s14, 1
      %p31 = por %p29, %p30
      %p32 = scmp.ne.s32.totalorder %s24, %s27
      %p33 = scmp.eq.s32.totalorder %s14, 0
      %p34 = por %p32, %p33
      %p35 = scmp.ne.s32.totalorder %s24, %s27
      %p36 = scmp.eq.s32.totalorder %s19, 1
      %p37 = por %p35, %p36
      %p38 = scmp.ne.s32.totalorder %s27, %s28
      %p39 = scmp.eq.s32.totalorder %s19, 0
      %p40 = por %p38, %p39
      %p41 = scmp.ne.s32.totalorder %s27, %s28
      %p42 = scmp.eq.s32.totalorder %s20, 1
      %p43 = por %p41, %p42
      %p45 = scmp.ne.s32.totalorder %s28, %s44
      %p46 = scmp.eq.s32.totalorder %s20, 0
      %p47 = por %p45, %p46
      %s49 = sadd.s32 %s48, 1
      %p52 = scmp.eq.s32.totalorder %s14, 1
      %p53 = scmp.ne.s32.totalorder %s48, %s50
      %p54 = scmp.eq.s32.totalorder %s14, 0
      %p55 = por %p53, %p54
      %p56 = scmp.ne.s32.totalorder %s48, %s50
      %p57 = scmp.eq.s32.totalorder %s19, 1
      %p58 = por %p56, %p57
      %p59 = scmp.ne.s32.totalorder %s50, %s51
      %p60 = scmp.eq.s32.totalorder %s19, 0
      %p61 = por %p59, %p60
      %p62 = scmp.ne.s32.totalorder %s50, %s51
      %p63 = scmp.eq.s32.totalorder %s20, 1
      %p64 = por %p62, %p63
      %p66 = scmp.ne.s32.totalorder %s51, %s65
      %p67 = scmp.eq.s32.totalorder %s20, 0
      %p68 = por %p66, %p67
      %s70 = sadd.s32 %s69, 1
      %p73 = scmp.eq.s32.totalorder %s14, 1
      %p74 = scmp.ne.s32.totalorder %s69, %s71
      %p75 = scmp.eq.s32.totalorder %s14, 0
      %p76 = por %p74, %p75
      %p77 = scmp.ne.s32.totalorder %s69, %s71
      %p78 = scmp.eq.s32.totalorder %s19, 1
      %p79 = por %p77, %p78
      %p80 = scmp.ne.s32.totalorder %s71, %s72
      %p81 = scmp.eq.s32.totalorder %s19, 0
      %p82 = por %p80, %p81
      %p83 = scmp.ne.s32.totalorder %s71, %s72
      %p84 = scmp.eq.s32.totalorder %s20, 1
      %p85 = por %p83, %p84
      %p87 = scmp.ne.s32.totalorder %s72, %s86
      %p88 = scmp.eq.s32.totalorder %s20, 0
      %p89 = por %p87, %p88
      %s91 = sadd.s32 %s90, 1
      %p94 = scmp.eq.s32.totalorder %s14, 1
      %p95 = scmp.ne.s32.totalorder %s90, %s92
      %p96 = scmp.eq.s32.totalorder %s14, 0
      %p97 = por %p95, %p96
      %p98 = scmp.ne.s32.totalorder %s90, %s92
      %p99 = scmp.eq.s32.totalorder %s19, 1
      %p100 = por %p98, %p99
      %p101 = scmp.ne.s32.totalorder %s92, %s93
      %p102 = scmp.eq.s32.totalorder %s19, 0
      %p103 = por %p101, %p102
      %p104 = scmp.ne.s32.totalorder %s92, %s93
      %p105 = scmp.eq.s32.totalorder %s20, 1
      %p106 = por %p104, %p105
      %p108 = scmp.ne.s32.totalorder %s93, %s107
      %p109 = scmp.eq.s32.totalorder %s20, 0
      %p110 = por %p108, %p109
      %s112 = sadd.s32 %s111, 1
      %p115 = scmp.eq.s32.totalorder %s14, 1
      %p116 = scmp.ne.s32.totalorder %s111, %s113
      %p117 = scmp.eq.s32.totalorder %s14, 0
      %p118 = por %p116, %p117
      %p119 = scmp.ne.s32.totalorder %s111, %s113
      %p120 = scmp.eq.s32.totalorder %s19, 1
      %p121 = por %p119, %p120
      %p122 = scmp.ne.s32.totalorder %s113, %s114
      %p123 = scmp.eq.s32.totalorder %s19, 0
      %p124 = por %p122, %p123
      %p125 = scmp.ne.s32.totalorder %s113, %s114
      %p126 = scmp.eq.s32.totalorder %s20, 1
      %p127 = por %p125, %p126
      %p129 = scmp.ne.s32.totalorder %s114, %s128
      %p130 = scmp.eq.s32.totalorder %s20, 0
      %p131 = por %p129, %p130
      %s132 = ssub.s32 %s14, %s21
      %p133 = scmp.eq.s32.totalorder %s132, 0
      %s135 = sadd.s32 %s134, 1
      %s136 = scalar_select %p133, %s134, %s135
      %p139 = pneg %p133
      %p140 = scmp.eq.s32.totalorder %s14, 1
      %p141 = por %p139, %p140
      %p142 = scmp.ne.s32.totalorder %s134, %s137
      %p143 = scmp.eq.s32.totalorder %s14, 0
      %p144 = por %p142, %p143
      %p145 = scmp.ne.s32.totalorder %s134, %s137
      %p146 = scmp.eq.s32.totalorder %s19, 1
      %p147 = por %p145, %p146
      %p148 = scmp.ne.s32.totalorder %s137, %s138
      %p149 = scmp.eq.s32.totalorder %s19, 0
      %p150 = por %p148, %p149
      %p151 = scmp.ne.s32.totalorder %s137, %s138
      %p152 = scmp.eq.s32.totalorder %s20, 1
      %p153 = por %p151, %p152
      %p155 = scmp.ne.s32.totalorder %s138, %s154
      %p156 = scmp.eq.s32.totalorder %s20, 0
      %p157 = por %p155, %p156
      %p158 = scmp.le.s32.totalorder 1, %s14
      %p159 = scmp.lt.s32.totalorder %s14, 3
      %p160 = pnand %p158, %p159
      %p161 = pneg %p160
      // Predicated region
      $region9: #{_embed_forward.1} parent=5 // pred_check
        _
      $region10: #{_embed_forward.1} parent=5 // pred_check_branch
        %163 = sbr.rel (%p160) target = $region12
      $region11: #{_embed_forward.1} parent=5 // pred_region
        %s164 = ssub.s32 %s14, 1
        // Predicated region
        $region13: #{_embed_forward.1} parent=11 // pred_check
          %p165 = pneg %p61
        $region14: #{_embed_forward.1} parent=11 // pred_check_branch
          %167 = sbr.rel (%p165) target = $region16
        $region15: #{_embed_forward.1} parent=11 // pred_region
          _
        $region16: #{_embed_forward.1} parent=11 // pred_fallthru
          _
        // Predicated region
        $region17: #{_embed_forward.1} parent=11 // pred_check
          %p168 = pneg %p82
        $region18: #{_embed_forward.1} parent=11 // pred_check_branch
          %170 = sbr.rel (%p168) target = $region20
        $region19: #{_embed_forward.1} parent=11 // pred_region
          _
        $region20: #{_embed_forward.1} parent=11 // pred_fallthru
          _
        // Predicated region
        $region21: #{_embed_forward.1} parent=11 // pred_check
          %p171 = pneg %p103
        $region22: #{_embed_forward.1} parent=11 // pred_check_branch
          %173 = sbr.rel (%p171) target = $region24
        $region23: #{_embed_forward.1} parent=11 // pred_region
          _
        $region24: #{_embed_forward.1} parent=11 // pred_fallthru
          _
        // Predicated region
        $region25: #{_embed_forward.1} parent=11 // pred_check
          %p174 = pneg %p124
        $region26: #{_embed_forward.1} parent=11 // pred_check_branch
          %176 = sbr.rel (%p174) target = $region28
        $region27: #{_embed_forward.1} parent=11 // pred_region
          _
        $region28: #{_embed_forward.1} parent=11 // pred_fallthru
          _
      $region12: #{_embed_forward.1} parent=5 // pred_fallthru
        _
      %p177 = scmp.lt.s32.totalorder %s14, 2
      // Predicated region
      $region29: #{_embed_forward.1} parent=5 // pred_check
        %p178 = pneg %p177
      $region30: #{_embed_forward.1} parent=5 // pred_check_branch
        %180 = sbr.rel (%p178) target = $region32
      $region31: #{_embed_forward.1} parent=5 // pred_region
        // Predicated region
        $region33: #{_embed_forward.1} parent=31 // pred_check
          %p181 = pneg %p34
        $region34: #{_embed_forward.1} parent=31 // pred_check_branch
          %183 = sbr.rel (%p181) target = $region36
        $region35: #{_embed_forward.1} parent=31 // pred_region
          %s184 = smul.u32 2, %s14
          %p185 = scmp.lt.s32.totalorder %s184, 3
          %s186 = scalar_select %p185, %s184, 3
          %s187 = smul.addr %s186, 4
          %s188 = scalar_lea.vmem %s0, %s187
          %s189 = smul.u32 2, %s14
        $region36: #{_embed_forward.1} parent=31 // pred_fallthru
          _
      $region32: #{_embed_forward.1} parent=5 // pred_fallthru
        _
      %p190 = scmp.le.s32.totalorder 1, %s14
      %p191 = scmp.lt.s32.totalorder %s14, 3
      %p192 = pnand %p190, %p191
      %p193 = pneg %p192
      // Predicated region
      $region37: #{_embed_forward.1} parent=5 // pred_check
        _
      $region38: #{_embed_forward.1} parent=5 // pred_check_branch
        %195 = sbr.rel (%p192) target = $region40
      $region39: #{_embed_forward.1} parent=5 // pred_region
        %s196 = ssub.s32 %s14, 1
        %s197 = smul.u32 2, %s19
        %p198 = scmp.lt.s32.totalorder %s197, 3
        %s199 = scalar_select %p198, %s197, 3
        %s200 = smul.addr %s199, 4
        %s201 = scalar_lea.vmem %s0, %s200
        %p202 = pneg %p40
        %p203 = pneg %p37
        %p204 = pneg %p61
        %p205 = pneg %p58
        %p206 = pneg %p82
        %p207 = pneg %p79
        %p208 = pneg %p103
        %p209 = pneg %p100
        %p210 = pneg %p124
        %p211 = pneg %p121
        %p212 = pneg %p150
        %p213 = pneg %p147
        %s214 = sand.u32 %s137, 1
        %s215 = scalar_lea.sflag [#allocation3], %s214
        %s216 = sand.u32 %s137, 1
        %s217 = smul.addr %s216, 16
        %s218 = scalar_lea.vmem [#allocation2], %s217
        %s219 = smul.u32 2, %s19
        %p220 = scmp.lt.s32.totalorder %s219, 3
        %s221 = scalar_select %p220, %s219, 3
        %s222 = smul.addr %s221, 4
        %s223 = scalar_lea.vmem %s0, %s222
        %s224 = smul.u32 2, %s19
        %s225 = smul.u32 2, %s19
        %v227 = vld [vmem:[%s223] sm:$0xf]
        %v228 = vld [vmem:[%s223 + $0x4] sm:$0xf]
        %v229 = vld [vmem:[%s1] sm:$0xf]
        %v230 = vld [vmem:[%s1 + $0x4] sm:$0xf]
        %v231 = vld [vmem:[%s1 + $0x8] sm:$0xf]
        %v232 = vld [vmem:[%s1 + $0xc] sm:$0xf]
        %v233 = vld [vmem:[%s1 + $0x10] sm:$0xf]
        %v234 = vld [vmem:[%s1 + $0x14] sm:$0xf]
        %v235 = vld [vmem:[%s1 + $0x18] sm:$0xf]
        %v236 = vld [vmem:[%s1 + $0x1c] sm:$0xf]
        %v237 = vld [vmem:[%s2] sm:$0x1]
        %v239 = vlaneseq
        %v240 = vshrl.u32 %v239, 7
        %v241 = vsub.s32 0, %v240
        %v242 = vrot.slane %v237, %v241
        %v246 = vunpack.c.l.b16 %v227
        %v247 = vunpack.c.l.b16 %v228
        %v248 = vpack.c.b16 %v247, %v246
        %v257 = vunpack.c.l.b16 %v229
        %v258 = vunpack.c.l.b16 %v230
        %v259 = vunpack.c.l.b16 %v231
        %v260 = vunpack.c.l.b16 %v232
        %v261 = vunpack.c.l.b16 %v233
        %v262 = vunpack.c.l.b16 %v234
        %v263 = vunpack.c.l.b16 %v235
        %v264 = vunpack.c.l.b16 %v236
        %v265 = vpack.c.b16 %v258, %v257
        %v266 = vpack.c.b16 %v260, %v259
        %v267 = vpack.c.b16 %v262, %v261
        %v268 = vpack.c.b16 %v264, %v263
        %vm273 = vcmask 523264
        %v275 = vsel %vm273, %v248, 0
        %277 = vmatprep.subr.bf16.mxu0 0
        %278 = vmatpush1.bf16.msra.mxu0 %v265
        %279 = vmatprep.subr.bf16.mxu0 0
        %280 = vmatpush1.bf16.msra.mxu0 %v266
        %281 = vmatprep.subr.bf16.mxu0 0
        %282 = vmatpush1.bf16.msra.mxu0 %v267
        %283 = vmatprep.subr.bf16.mxu0 0
        %284 = vmatpush1.bf16.msra.mxu0 %v268
        %285 = vmatprep.subr.bf16.mxu0 0
        %286 = vmatpush1.bf16.msra.mxu0 0
        %287 = vmatprep.subr.bf16.mxu0 0
        %288 = vmatpush1.bf16.msra.mxu0 0
        %289 = vmatprep.subr.bf16.mxu0 0
        %290 = vmatpush1.bf16.msra.mxu0 0
        %291 = vmatprep.subr.bf16.mxu0 0
        %292 = vmatpush1.bf16.msra.mxu0 0
        %293 = vmatprep.subr.bf16.mxu0 0
        %294 = vmatpush1.bf16.msra.mxu0 0
        %295 = vmatprep.subr.bf16.mxu0 0
        %296 = vmatpush1.bf16.msra.mxu0 0
        %297 = vmatprep.subr.bf16.mxu0 0
        %298 = vmatpush1.bf16.msra.mxu0 0
        %299 = vmatprep.subr.bf16.mxu0 0
        %300 = vmatpush1.bf16.msra.mxu0 0
        %301 = vmatprep.subr.bf16.mxu0 0
        %302 = vmatpush1.bf16.msra.mxu0 0
        %303 = vmatprep.subr.bf16.mxu0 0
        %304 = vmatpush1.bf16.msra.mxu0 0
        %305 = vmatprep.subr.bf16.mxu0 0
        %306 = vmatpush1.bf16.msra.mxu0 0
        %307 = vmatprep.subr.bf16.mxu0 0
        %308 = vmatpush1.bf16.msra.mxu0 0
        %309 = vmatprep.mubr.bf16.mxu0 0
        %310 = vmatmul.mubr.bf16.gmra.mrb[0].mxu0 %v275
        %v311 = vpop.f32.mrb[0].mxu0
        %v312 = vadd.f32 %v242, %v311
        %v313 = vpop.f32.mrb[0].mxu0
        %v314 = vpop.f32.mrb[0].mxu0
        %v315 = vadd.f32 %v242, %v314
        %v316 = vpop.f32.mrb[0].mxu0
        %317 = vdwg.mxu0
        %318 = vadd.xlane.f32.xlu0 %v312
        %v319 = vpop.xlane.xlu0 %318
        %320 = vadd.xlane.f32.xlu0 %v315
        %v321 = vpop.xlane.xlu0 %320
        %v322 = vrcp.pop 128.0
        %v323 = vmul.f32 %v319, %v322
        %v324 = vmul.f32 %v321, %v322
        %v325 = vsub.f32 %v312, %v323
        %v326 = vsub.f32 %v315, %v324
        %v327 = vmul.f32 %v325, %v325
        %v328 = vmul.f32 %v326, %v326
        %329 = vadd.xlane.f32.xlu0 %v327
        %v330 = vpop.xlane.xlu0 %329
        %331 = vadd.xlane.f32.xlu0 %v328
        %v332 = vpop.xlane.xlu0 %331
        %v333 = vmul.f32 %v330, %v322
        %v334 = vmul.f32 %v332, %v322
        %v335 = vadd.f32 %v333, 1e-05
        %v336 = vadd.f32 %v334, 1e-05
        %v337 = vrsqrt.pop %v335
        %v338 = vrsqrt.pop %v336
        %v339 = vmul.f32 %v325, %v337
        %v340 = vmul.f32 %v326, %v338
        %v341 = vld [vmem:[%s3] sm:$0x1]
        %v343 = vlaneseq
        %v344 = vshrl.u32 %v343, 7
        %v345 = vsub.s32 0, %v344
        %v346 = vrot.slane %v341, %v345
        %v348 = vmul.f32 %v339, %v346
        %v349 = vmul.f32 %v340, %v346
        %v350 = vld [vmem:[%s4] sm:$0x1]
        %v352 = vlaneseq
        %v353 = vshrl.u32 %v352, 7
        %v354 = vsub.s32 0, %v353
        %v355 = vrot.slane %v350, %v354
        %v357 = vadd.f32 %v348, %v355
        %v358 = vadd.f32 %v349, %v355
        %359 = vst [vmem:[%s218] sm:$0xff] %v357
        %360 = vst [vmem:[%s218 + $0x8] sm:$0xff] %v358
        %s361 = sand.u32 %s137, 1
        %s362 = scalar_lea.sflag [#allocation3], %s361
        %s363 = sand.u32 %s137, 1
        %s364 = smul.addr %s363, 16
        %s365 = scalar_lea.vmem [#allocation2], %s364
        // Predicated region
        $region41: #{_embed_forward.1} parent=39 // pred_check
          %p366 = pneg %p147
        $region42: #{_embed_forward.1} parent=39 // pred_check_branch
          %368 = sbr.rel (%p366) target = $region44
        $region43: #{_embed_forward.1} parent=39 // pred_region
          %s369 = smul.u32 2, %s19
          %s371 = ssub.s32 256, 256
          %372 = vsyncadd %s362, %s371
          %s373 = smul.addr %s369, 128
          %s374 = scalar_lea.hbm %s5, %s373
          %s375 = sshll.u32 %s365, 4
          %s376 = int_to_ptr.vmem [resolvable:$true] %s375
          %381 = dma.vmem_to_hbm [thread:$0]  %s376, 256, %s374, %s362, 128, 128, 8
        $region44: #{_embed_forward.1} parent=39 // pred_fallthru
          _
      $region40: #{_embed_forward.1} parent=5 // pred_fallthru
        _
      %p382 = scmp.le.s32.totalorder 2, %s14
      // Predicated region
      $region45: #{_embed_forward.1} parent=5 // pred_check
        %p383 = pneg %p382
      $region46: #{_embed_forward.1} parent=5 // pred_check_branch
        %385 = sbr.rel (%p383) target = $region48
      $region47: #{_embed_forward.1} parent=5 // pred_region
        %s386 = ssub.s32 %s14, 2
        // Predicated region
        $region49: #{_embed_forward.1} parent=47 // pred_check
          %p387 = pneg %p153
        $region50: #{_embed_forward.1} parent=47 // pred_check_branch
          %389 = sbr.rel (%p387) target = $region52
        $region51: #{_embed_forward.1} parent=47 // pred_region
          %s390 = sand.u32 %s138, 1
          %s391 = scalar_lea.sflag [#allocation3], %s390
          %s392 = sand.u32 %s138, 1
          %s393 = smul.addr %s392, 16
          %s394 = scalar_lea.vmem [#allocation2], %s393
          %395 = dma.done %s391, 256
        $region52: #{_embed_forward.1} parent=47 // pred_fallthru
          _
      $region48: #{_embed_forward.1} parent=5 // pred_fallthru
        _
    $region6: #{_embed_forward.1} parent=1 // loop_footer
      %s18 = sadd.s32 1, %s14
    $region7: #{_embed_forward.1} parent=1 // loop_footer_branch
      %13 = sbr.rel target = $region3
    $region8: #{_embed_forward.1} parent=1 // loop_exit
      _
    %396 = vsyncpa [#allocation3], 1
    %s397 = scalar_lea.sflag [#allocation3], 1
    %398 = vsyncpa %s397, 1

</llo_original>
